<compile_context>
chip_gen: v7x
topology: tpu7x:2x2x1
jax: 0.10.0
libtpu: 0.0.40
codegen_flags: <defaults>
</compile_context>

<pallas_src>
import functools

import jax
import jax.numpy as jnp
from jax.experimental import pallas as pl
from jax.experimental.pallas import tpu as pltpu


def _round_up(n, m):
    return ((n + m - 1) // m) * m


def _fused_mlp_kernel(x_ref, w1_ref, b1_ref, w2p_ref, b2p_ref, w2v_ref, b2v_ref,
                      o_pi_ref, o_vf_ref, *, hp):
    """Fused 2-layer tanh MLP for both branches.

    x:    [TB, F]
    w1:   [F, HP+HV]  (pi layer-1 cols [0, H_pi), zeros to HP, then vf layer-1)
    w2p:  [HP, HP]    (pi layer-2, zero-padded)   w2v: [HV, HV] (vf layer-2)
    outs: o_pi [TB, HP], o_vf [TB, HV]  (both lane-dense multiples of 128)

    Biases / accumulation / tanh stay f32; activations are cast to the weight
    dtype only at the MXU inputs (bf16-weight friendly, v5e-safe).
    """
    x = x_ref[...].astype(w1_ref.dtype)
    # Layer 1 for both branches in one MXU pass.
    h = jnp.tanh(
        jnp.dot(x, w1_ref[...], preferred_element_type=jnp.float32)
        + b1_ref[...]
    )
    h_pi = h[:, :hp].astype(w2p_ref.dtype)
    h_vf = h[:, hp:].astype(w2v_ref.dtype)
    # Layer 2, per branch (keep split: right MXU shapes, no wasted FLOPs).
    y_pi = jnp.tanh(
        jnp.dot(h_pi, w2p_ref[...], preferred_element_type=jnp.float32)
        + b2p_ref[...]
    )
    y_vf = jnp.tanh(
        jnp.dot(h_vf, w2v_ref[...], preferred_element_type=jnp.float32)
        + b2v_ref[...]
    )
    o_pi_ref[...] = y_pi.astype(o_pi_ref.dtype)
    o_vf_ref[...] = y_vf.astype(o_vf_ref.dtype)


def _pick_batch_tile(B, max_tile=1024):
    """Batch tile: multiple of 8 (sublane), <= max_tile (VMEM), and an EVEN
    number of grid steps so v7x's two TensorCores both get work."""
    n = max(2, -(-B // max_tile))
    if n % 2:
        n += 1
    return _round_up(-(-B // n), 8)


def fused_mlp2_tanh(x, w1, b1, w2_pi, b2_pi, w2_vf, b2_vf, *, hp, hv,
                    max_batch_tile=1024, small_batch=128):
    """Both branches of CustomNetwork in one pallas_call.

    Returns (pi_latent_padded [B, hp], vf_latent_padded [B, hv])."""
    B, F = x.shape
    out_shape = (jax.ShapeDtypeStruct((B, hp), x.dtype),
                 jax.ShapeDtypeStruct((B, hv), x.dtype))
    kern = functools.partial(_fused_mlp_kernel, hp=hp)
    args = (x, w1, b1, w2_pi, b2_pi, w2_vf, b2_vf)

    cost = pl.CostEstimate(
        flops=2 * B * (F * (hp + hv) + hp * hp + hv * hv),
        transcendentals=2 * B * (hp + hv),  # tanh at both layers
        bytes_accessed=int(sum(int(a.size) * a.dtype.itemsize for a in args)
                           + B * (hp + hv) * x.dtype.itemsize),
    )

    if B <= small_batch:
        # Small-batch inference path: no grid / pipeline scaffolding, whole
        # problem lives in VMEM for the single invocation (<~1 MiB working
        # set). Dominated by dispatch + weight DMA; nothing to tune here.
        vmem = lambda: pl.BlockSpec(memory_space=pltpu.MemorySpace.VMEM)
        return pl.pallas_call(
            kern,
            out_shape=out_shape,
            in_specs=[vmem() for _ in range(7)],
            out_specs=[vmem(), vmem()],
            cost_estimate=cost,
        )(*args)

    # Large-batch (training) path: cdiv grid over the batch (the ragged last
    # tile is handled by the pipeline: OOB rows compute on stale VMEM data and
    # are dropped on writeback), weights VMEM-resident via constant index_map,
    # batch axis "parallel" for megacore / v7x two-TC sharding.
    tb = _pick_batch_tile(B, max_batch_tile)
    const = lambda shape: pl.BlockSpec(shape, lambda i: (0,) * len(shape))
    return pl.pallas_call(
        kern,
        out_shape=out_shape,
        grid=(pl.cdiv(B, tb),),
        in_specs=[
            pl.BlockSpec((tb, F), lambda i: (i, 0)),
            const(w1.shape), const(b1.shape),
            const(w2_pi.shape), const(b2_pi.shape),
            const(w2_vf.shape), const(b2_vf.shape),
        ],
        out_specs=[
            pl.BlockSpec((tb, hp), lambda i: (i, 0)),
            pl.BlockSpec((tb, hv), lambda i: (i, 0)),
        ],
        compiler_params=pltpu.CompilerParams(
            dimension_semantics=("parallel",)),
        cost_estimate=cost,
    )(*args)


# ----------------------------- parameters ----------------------------------


def init_linear_params(key, in_dim, out_dim, dtype=jnp.float32):
    """Deterministic init matching nn.Linear's U(-1/sqrt(in), 1/sqrt(in))."""
    kw, kb = jax.random.split(key)
    bound = 1.0 / jnp.sqrt(jnp.float32(in_dim))
    w = jax.random.uniform(kw, (in_dim, out_dim), dtype, -bound, bound)
    b = jax.random.uniform(kb, (1, out_dim), dtype, -bound, bound)
    return w, b


def make_custom_network_params(key, feature_dim, last_layer_dim_pi=64,
                               last_layer_dim_vf=256, dtype=jnp.float32):
    k = jax.random.split(key, 4)
    pi_w1, pi_b1 = init_linear_params(k[0], feature_dim, last_layer_dim_pi, dtype)
    pi_w2, pi_b2 = init_linear_params(k[1], last_layer_dim_pi, last_layer_dim_pi, dtype)
    vf_w1, vf_b1 = init_linear_params(k[2], feature_dim, last_layer_dim_vf, dtype)
    vf_w2, vf_b2 = init_linear_params(k[3], last_layer_dim_vf, last_layer_dim_vf, dtype)
    return {
        "policy": (pi_w1, pi_b1, pi_w2, pi_b2),
        "value": (vf_w1, vf_b1, vf_w2, vf_b2),
    }


def pack_params(params, feature_dim, h_pi, h_vf, weight_dtype=jnp.float32):
    """Pack both branches into the fused-kernel layout (lane-dense, padded).

    Weights may be bf16 (v6e/v7x: halves DMA, full-rate MXU); biases stay f32
    since they are added post-MXU in f32.
    """
    pi_w1, pi_b1, pi_w2, pi_b2 = params["policy"]
    vf_w1, vf_b1, vf_w2, vf_b2 = params["value"]
    hp = _round_up(h_pi, 128)
    hv = _round_up(h_vf, 128)
    F = feature_dim

    w1 = jnp.zeros((F, hp + hv), weight_dtype)
    w1 = w1.at[:, :h_pi].set(pi_w1.astype(weight_dtype))
    w1 = w1.at[:, hp:hp + h_vf].set(vf_w1.astype(weight_dtype))
    b1 = jnp.zeros((1, hp + hv), jnp.float32)
    b1 = b1.at[:, :h_pi].set(pi_b1.astype(jnp.float32))
    b1 = b1.at[:, hp:hp + h_vf].set(vf_b1.astype(jnp.float32))

    w2_pi = jnp.zeros((hp, hp), weight_dtype).at[:h_pi, :h_pi].set(
        pi_w2.astype(weight_dtype))
    b2_pi = jnp.zeros((1, hp), jnp.float32).at[:, :h_pi].set(
        pi_b2.astype(jnp.float32))
    w2_vf = jnp.zeros((hv, hv), weight_dtype).at[:h_vf, :h_vf].set(
        vf_w2.astype(weight_dtype))
    b2_vf = jnp.zeros((1, hv), jnp.float32).at[:, :h_vf].set(
        vf_b2.astype(jnp.float32))

    return {
        "w1": w1, "b1": b1,
        "w2_pi": w2_pi, "b2_pi": b2_pi,
        "w2_vf": w2_vf, "b2_vf": b2_vf,
    }


# ------------------------------ forward -------------------------------------


@functools.partial(jax.jit, static_argnames=("h_pi", "h_vf"))
def custom_network_forward(packed, features, *, h_pi, h_vf):
    """Returns (latent_policy, latent_value), matching CustomNetwork.forward."""
    hp = _round_up(h_pi, 128)
    hv = _round_up(h_vf, 128)
    out_pi, out_vf = fused_mlp2_tanh(
        features,
        packed["w1"], packed["b1"],
        packed["w2_pi"], packed["b2_pi"],
        packed["w2_vf"], packed["b2_vf"],
        hp=hp, hv=hv,
    )
    latent_pi = out_pi if h_pi == hp else out_pi[:, :h_pi]
    latent_vf = out_vf if h_vf == hv else out_vf[:, :h_vf]
    return latent_pi, latent_vf


if __name__ == "__main__":
    key = jax.random.PRNGKey(0)
    k_params, k_feat, k_big, k_ragged = jax.random.split(key, 4)

    batch = 8
    feature_dim = 32
    last_layer_dim_pi = 64
    last_layer_dim_vf = 256

    params = make_custom_network_params(
        k_params, feature_dim, last_layer_dim_pi, last_layer_dim_vf
    )
    packed = pack_params(params, feature_dim, last_layer_dim_pi, last_layer_dim_vf)
    features = jax.random.normal(k_feat, (batch, feature_dim), jnp.float32)

    latent_pi, latent_vf = custom_network_forward(
        packed, features, h_pi=last_layer_dim_pi, h_vf=last_layer_dim_vf
    )
    jax.block_until_ready((latent_pi, latent_vf))

    # Pure-JAX reference.
    def ref_branch(x, w1, b1, w2, b2):
        return jnp.tanh(jnp.tanh(x @ w1 + b1) @ w2 + b2)

    ref_pi = ref_branch(features, *params["policy"])
    ref_vf = ref_branch(features, *params["value"])
    assert latent_pi.shape == (batch, last_layer_dim_pi)
    assert latent_vf.shape == (batch, last_layer_dim_vf)
    assert jnp.allclose(latent_pi, ref_pi, atol=1e-5, rtol=1e-5)
    assert jnp.allclose(latent_vf, ref_vf, atol=1e-5, rtol=1e-5)

    # Big-batch (grid) path: B=512 -> 2 even parallel tiles of 256.
    big_batch = 512
    features_big = jax.random.normal(k_big, (big_batch, feature_dim), jnp.float32)
    big_pi, big_vf = custom_network_forward(
        packed, features_big, h_pi=last_layer_dim_pi, h_vf=last_layer_dim_vf
    )
    jax.block_until_ready((big_pi, big_vf))
    assert jnp.allclose(big_pi, ref_branch(features_big, *params["policy"]),
                        atol=1e-5, rtol=1e-5)
    assert jnp.allclose(big_vf, ref_branch(features_big, *params["value"]),
                        atol=1e-5, rtol=1e-5)

    # Ragged cdiv-grid path: B=600 -> 2 tiles of 304, last tile padded/dropped.
    ragged_batch = 600
    features_rag = jax.random.normal(k_ragged, (ragged_batch, feature_dim),
                                     jnp.float32)
    rag_pi, rag_vf = custom_network_forward(
        packed, features_rag, h_pi=last_layer_dim_pi, h_vf=last_layer_dim_vf
    )
    jax.block_until_ready((rag_pi, rag_vf))
    assert jnp.allclose(rag_pi, ref_branch(features_rag, *params["policy"]),
                        atol=1e-5, rtol=1e-5)
    assert jnp.allclose(rag_vf, ref_branch(features_rag, *params["value"]),
                        atol=1e-5, rtol=1e-5)

    # bf16-weight path (v6e/v7x DMA saving): bf16 MXU inputs, f32 accumulate,
    # f32 bias/tanh/output. Looser tolerance vs. the f32 reference.
    packed_bf16 = pack_params(params, feature_dim, last_layer_dim_pi,
                              last_layer_dim_vf, weight_dtype=jnp.bfloat16)
    bf_pi, bf_vf = custom_network_forward(
        packed_bf16, features_big, h_pi=last_layer_dim_pi,
        h_vf=last_layer_dim_vf
    )
    jax.block_until_ready((bf_pi, bf_vf))
    assert jnp.allclose(bf_pi, ref_branch(features_big, *params["policy"]),
                        atol=5e-2)
    assert jnp.allclose(bf_vf, ref_branch(features_big, *params["value"]),
                        atol=5e-2)

    print("KERNEL_OK")
</pallas_src>

<mosaic_0001>
module attributes {stable_mosaic.version = 11 : i64} {
  func.func @_fused_mlp_kernel(%arg0: memref<8x32xf32, #tpu.memory_space<vmem>>, %arg1: memref<32x384xf32, #tpu.memory_space<vmem>>, %arg2: memref<1x384xf32, #tpu.memory_space<vmem>>, %arg3: memref<128x128xf32, #tpu.memory_space<vmem>>, %arg4: memref<1x128xf32, #tpu.memory_space<vmem>>, %arg5: memref<256x256xf32, #tpu.memory_space<vmem>>, %arg6: memref<1x256xf32, #tpu.memory_space<vmem>>, %arg7: memref<8x128xf32, #tpu.memory_space<vmem>>, %arg8: memref<8x256xf32, #tpu.memory_space<vmem>>) attributes {dimension_semantics = [], scalar_prefetch = 0 : i64, scratch_operands = 0 : i64, tpu.core_type = #tpu.core_type<tc>} {
    %c0 = arith.constant 0 : index
    %c0_0 = arith.constant 0 : index
    %0 = vector.load %arg0[%c0, %c0_0] : memref<8x32xf32, #tpu.memory_space<vmem>>, vector<8x32xf32>
    %c0_1 = arith.constant 0 : index
    %c0_2 = arith.constant 0 : index
    %1 = vector.load %arg1[%c0_1, %c0_2] : memref<32x384xf32, #tpu.memory_space<vmem>>, vector<32x384xf32>
    %cst = arith.constant dense<0.000000e+00> : vector<8x384xf32>
    %2 = tpu.matmul %0, %1, %cst {dimension_numbers = #tpu.dot_dimension_numbers<[1], [0], [0], [1], [0, 0, 1, 1], [], []>} : vector<8x32xf32>, vector<32x384xf32>, vector<8x384xf32> -> vector<8x384xf32>
    %c0_3 = arith.constant 0 : index
    %c0_4 = arith.constant 0 : index
    %3 = vector.load %arg2[%c0_3, %c0_4] : memref<1x384xf32, #tpu.memory_space<vmem>>, vector<1x384xf32>
    %4 = vector.broadcast %3 : vector<1x384xf32> to vector<8x384xf32>
    %5 = arith.addf %2, %4 : vector<8x384xf32>
    %6 = math.tanh %5 : vector<8x384xf32>
    %7 = vector.extract_strided_slice %6 {offsets = [0, 0], sizes = [8, 128], strides = [1, 1]} : vector<8x384xf32> to vector<8x128xf32>
    %8 = vector.extract_strided_slice %6 {offsets = [0, 128], sizes = [8, 256], strides = [1, 1]} : vector<8x384xf32> to vector<8x256xf32>
    %c0_5 = arith.constant 0 : index
    %c0_6 = arith.constant 0 : index
    %9 = vector.load %arg3[%c0_5, %c0_6] : memref<128x128xf32, #tpu.memory_space<vmem>>, vector<128x128xf32>
    %cst_7 = arith.constant dense<0.000000e+00> : vector<8x128xf32>
    %10 = tpu.matmul %7, %9, %cst_7 {dimension_numbers = #tpu.dot_dimension_numbers<[1], [0], [0], [1], [0, 0, 1, 1], [], []>} : vector<8x128xf32>, vector<128x128xf32>, vector<8x128xf32> -> vector<8x128xf32>
    %c0_8 = arith.constant 0 : index
    %c0_9 = arith.constant 0 : index
    %11 = vector.load %arg4[%c0_8, %c0_9] : memref<1x128xf32, #tpu.memory_space<vmem>>, vector<1x128xf32>
    %12 = vector.broadcast %11 : vector<1x128xf32> to vector<8x128xf32>
    %13 = arith.addf %10, %12 : vector<8x128xf32>
    %14 = math.tanh %13 : vector<8x128xf32>
    %c0_10 = arith.constant 0 : index
    %c0_11 = arith.constant 0 : index
    %15 = vector.load %arg5[%c0_10, %c0_11] : memref<256x256xf32, #tpu.memory_space<vmem>>, vector<256x256xf32>
    %cst_12 = arith.constant dense<0.000000e+00> : vector<8x256xf32>
    %16 = tpu.matmul %8, %15, %cst_12 {dimension_numbers = #tpu.dot_dimension_numbers<[1], [0], [0], [1], [0, 0, 1, 1], [], []>} : vector<8x256xf32>, vector<256x256xf32>, vector<8x256xf32> -> vector<8x256xf32>
    %c0_13 = arith.constant 0 : index
    %c0_14 = arith.constant 0 : index
    %17 = vector.load %arg6[%c0_13, %c0_14] : memref<1x256xf32, #tpu.memory_space<vmem>>, vector<1x256xf32>
    %18 = vector.broadcast %17 : vector<1x256xf32> to vector<8x256xf32>
    %19 = arith.addf %16, %18 : vector<8x256xf32>
    %20 = math.tanh %19 : vector<8x256xf32>
    %c0_15 = arith.constant 0 : index
    %c0_16 = arith.constant 0 : index
    %21 = vector.load %arg7[%c0_15, %c0_16] : memref<8x128xf32, #tpu.memory_space<vmem>>, vector<8x128xf32>
    tpu.vector_store %arg7[%c0_15, %c0_16], %14 {strides = array<i32>} : memref<8x128xf32, #tpu.memory_space<vmem>>, vector<8x128xf32>,
    %c0_17 = arith.constant 0 : index
    %c0_18 = arith.constant 0 : index
    %22 = vector.load %arg8[%c0_17, %c0_18] : memref<8x256xf32, #tpu.memory_space<vmem>>, vector<8x256xf32>
    tpu.vector_store %arg8[%c0_17, %c0_18], %20 {strides = array<i32>} : memref<8x256xf32, #tpu.memory_space<vmem>>, vector<8x256xf32>,
    return
  }
}

</mosaic_0001>

<llo_original>
// kernel: custom_network_forward.1
$region0: #{custom_network_forward.1}
  #allocation0 [shape = 'u32[]', space=smem, size = 0x4, offset = 0x4, fixed_abs, tag = 'smem constant byte address 0x4 - core index']
  #allocation1 [shape = 'u32[144,128]{1,0:T(1,128)}', space=vmem, size = 0x12000, scoped, tag = 'internal scratch']
  %s0 = inlined_call_operand.vmem [shape: f32[8,32], index: 0, kind: input, shape index: {}]
  %s1 = inlined_call_operand.hbm [shape: f32[32,384], index: 1, kind: input, shape index: {}]
  %s2 = inlined_call_operand.hbm [shape: f32[1,384], index: 2, kind: input, shape index: {}]
  %s3 = inlined_call_operand.hbm [shape: f32[128,128], index: 3, kind: input, shape index: {}]
  %s4 = inlined_call_operand.vmem [shape: f32[1,128], index: 4, kind: input, shape index: {}]
  %s5 = inlined_call_operand.hbm [shape: f32[256,256], index: 5, kind: input, shape index: {}]
  %s6 = inlined_call_operand.vmem [shape: f32[1,256], index: 6, kind: input, shape index: {}]
  %s7 = inlined_call_operand.hbm [shape: f32[8,128], index: 7, kind: output, shape index: {0}]
  %s8 = inlined_call_operand.hbm [shape: f32[8,256], index: 8, kind: output, shape index: {1}]
  %9 = xla_tuple %s7, %s8
  %s10 = sld [smem:[#allocation0]]
  $region62: #{custom_network_forward.1} parent=0
    _
  %s12 = ssub.s32 1, %s10
  %s13 = scalar_select 0, %s12, %s10
  $region1: #{custom_network_forward.1} parent=0
    #allocation2 [shape = 'u8[49152]{0}', space=vmem, size = 0xc000, scoped, tag = 'input window, operand 1, single buffered']
    #allocation3 [shape = 's32[1]{0}', space=sflag, size = 0x4, scoped, tag = 'scoped memory for custom_network_forward.1']
    #allocation4 [shape = 's32[1]{0}', space=sflag, size = 0x4, scoped, tag = 'scoped memory for custom_network_forward.1']
    #allocation5 [shape = 'u8[1536]{0}', space=vmem, size = 0x800, scoped, tag = 'input window, operand 2, single buffered']
    #allocation6 [shape = 's32[1]{0}', space=sflag, size = 0x4, scoped, tag = 'scoped memory for custom_network_forward.1']
    #allocation7 [shape = 'u8[65536]{0}', space=vmem, size = 0x10000, scoped, tag = 'input window, operand 3, single buffered']
    #allocation8 [shape = 'u8[262144]{0}', space=vmem, size = 0x40000, scoped, tag = 'input window, operand 5, single buffered']
    #allocation9 [shape = 's32[1]{0}', space=sflag, size = 0x4, scoped, tag = 'scoped memory for custom_network_forward.1']
    #allocation10 [shape = 'u8[4096]{0}', space=vmem, size = 0x1000, scoped, tag = 'output window, operand 0, single buffered']
    #allocation11 [shape = 'u8[8192]{0}', space=vmem, size = 0x2000, scoped, tag = 'output window, operand 1, single buffered']
    #allocation12 [shape = 's32[1]{0}', space=sflag, size = 0x4, scoped, tag = 'scoped memory for custom_network_forward.1']
    %14 = vsyncpa [#allocation3], 0
    %15 = vsyncpa [#allocation6], 0
    %16 = vsyncpa [#allocation9], 0
    %17 = vsyncpa [#allocation4], 0
    %18 = vsyncpa [#allocation12], 0
    // Predicated region
    $region2: #{custom_network_forward.1} parent=1 // pred_check
      _
    $region3: #{custom_network_forward.1} parent=1 // pred_check_branch
      %20 = sbr.rel (0) target = $region5
    $region4: #{custom_network_forward.1} parent=1 // pred_region
      _
    $region5: #{custom_network_forward.1} parent=1 // pred_fallthru
      _
    // Predicated region
    $region6: #{custom_network_forward.1} parent=1 // pred_check
      _
    $region7: #{custom_network_forward.1} parent=1 // pred_check_branch
      %22 = sbr.rel (0) target = $region9
    $region8: #{custom_network_forward.1} parent=1 // pred_region
      %s24 = ssub.s32 1536, 1536
      %25 = vsyncadd [#allocation3], %s24
      %s26 = sshll.u32 [#allocation2], 4
      %s27 = int_to_ptr.vmem [resolvable:$true] %s26
      %32 = dma.hbm_to_vmem [thread:$0]  %s1, 1536, %s27, [#allocation3], 384, 384, 24
    $region9: #{custom_network_forward.1} parent=1 // pred_fallthru
      _
    // Predicated region
    $region10: #{custom_network_forward.1} parent=1 // pred_check
      _
    $region11: #{custom_network_forward.1} parent=1 // pred_check_branch
      %34 = sbr.rel (0) target = $region13
    $region12: #{custom_network_forward.1} parent=1 // pred_region
      %s36 = ssub.s32 48, 48
      %37 = vsyncadd [#allocation6], %s36
      %s39 = sshll.u32 [#allocation5], 4
      %s40 = int_to_ptr.vmem [resolvable:$true] %s39
      %42 = dma.hbm_to_vmem [thread:$0]  %s2, 48, %s40, [#allocation6]
    $region13: #{custom_network_forward.1} parent=1 // pred_fallthru
      _
    // Predicated region
    $region14: #{custom_network_forward.1} parent=1 // pred_check
      _
    $region15: #{custom_network_forward.1} parent=1 // pred_check_branch
      %44 = sbr.rel (0) target = $region17
    $region16: #{custom_network_forward.1} parent=1 // pred_region
      %s46 = ssub.s32 2048, 2048
      %47 = vsyncadd [#allocation6], %s46
      %s48 = sshll.u32 [#allocation7], 4
      %s49 = int_to_ptr.vmem [resolvable:$true] %s48
      %54 = dma.hbm_to_vmem [thread:$0]  %s3, 2048, %s49, [#allocation6], 128, 128, 8
    $region17: #{custom_network_forward.1} parent=1 // pred_fallthru
      _
    // Predicated region
    $region18: #{custom_network_forward.1} parent=1 // pred_check
      _
    $region19: #{custom_network_forward.1} parent=1 // pred_check_branch
      %56 = sbr.rel (0) target = $region21
    $region20: #{custom_network_forward.1} parent=1 // pred_region
      _
    $region21: #{custom_network_forward.1} parent=1 // pred_fallthru
      _
    // Predicated region
    $region22: #{custom_network_forward.1} parent=1 // pred_check
      _
    $region23: #{custom_network_forward.1} parent=1 // pred_check_branch
      %58 = sbr.rel (0) target = $region25
    $region24: #{custom_network_forward.1} parent=1 // pred_region
      %s60 = ssub.s32 8192, 8192
      %61 = vsyncadd [#allocation9], %s60
      %s62 = sshll.u32 [#allocation8], 4
      %s63 = int_to_ptr.vmem [resolvable:$true] %s62
      %68 = dma.hbm_to_vmem [thread:$0]  %s5, 8192, %s63, [#allocation9], 256, 256, 16
    $region25: #{custom_network_forward.1} parent=1 // pred_fallthru
      _
    // Predicated region
    $region26: #{custom_network_forward.1} parent=1 // pred_check
      _
    $region27: #{custom_network_forward.1} parent=1 // pred_check_branch
      %70 = sbr.rel (0) target = $region29
    $region28: #{custom_network_forward.1} parent=1 // pred_region
      _
    $region29: #{custom_network_forward.1} parent=1 // pred_fallthru
      _
    // Predicated region
    $region30: #{custom_network_forward.1} parent=1 // pred_check
      _
    $region31: #{custom_network_forward.1} parent=1 // pred_check_branch
      %72 = sbr.rel (0) target = $region33
    $region32: #{custom_network_forward.1} parent=1 // pred_region
      %73 = dma.done [#allocation3], 1536
    $region33: #{custom_network_forward.1} parent=1 // pred_fallthru
      _
    // Predicated region
    $region34: #{custom_network_forward.1} parent=1 // pred_check
      _
    $region35: #{custom_network_forward.1} parent=1 // pred_check_branch
      %75 = sbr.rel (0) target = $region37
    $region36: #{custom_network_forward.1} parent=1 // pred_region
      %76 = dma.done [#allocation6], 48
    $region37: #{custom_network_forward.1} parent=1 // pred_fallthru
      _
    // Predicated region
    $region38: #{custom_network_forward.1} parent=1 // pred_check
      _
    $region39: #{custom_network_forward.1} parent=1 // pred_check_branch
      %78 = sbr.rel (0) target = $region41
    $region40: #{custom_network_forward.1} parent=1 // pred_region
      %79 = dma.done [#allocation6], 2048
    $region41: #{custom_network_forward.1} parent=1 // pred_fallthru
      _
    // Predicated region
    $region42: #{custom_network_forward.1} parent=1 // pred_check
      _
    $region43: #{custom_network_forward.1} parent=1 // pred_check_branch
      %81 = sbr.rel (0) target = $region45
    $region44: #{custom_network_forward.1} parent=1 // pred_region
      %82 = dma.done [#allocation9], 8192
    $region45: #{custom_network_forward.1} parent=1 // pred_fallthru
      _
    %v83 = vld [vmem:[%s0] sm:$0xff]
    %v84 = vld [vmem:[#allocation2] sm:$0xff]
    %v85 = vld [vmem:[#allocation2 + $0x8] sm:$0xff]
    %v86 = vld [vmem:[#allocation2 + $0x10] sm:$0xff]
    %v87 = vld [vmem:[#allocation2 + $0x18] sm:$0xff]
    %v88 = vld [vmem:[#allocation2 + $0x20] sm:$0xff]
    %v89 = vld [vmem:[#allocation2 + $0x28] sm:$0xff]
    %v90 = vld [vmem:[#allocation2 + $0x30] sm:$0xff]
    %v91 = vld [vmem:[#allocation2 + $0x38] sm:$0xff]
    %v92 = vld [vmem:[#allocation2 + $0x40] sm:$0xff]
    %v93 = vld [vmem:[#allocation2 + $0x48] sm:$0xff]
    %v94 = vld [vmem:[#allocation2 + $0x50] sm:$0xff]
    %v95 = vld [vmem:[#allocation2 + $0x58] sm:$0xff]
    %v96 = vld [vmem:[#allocation5] sm:$0x7]
    %v98 = vlaneseq
    %v99 = vshrl.u32 %v98, 7
    %v100 = vsub.s32 0, %v99
    %v101 = vrot.slane %v96, %v100
    %v102 = vlaneseq
    %v103 = vshrl.u32 %v102, 7
    %v104 = vsub.s32 1, %v103
    %v105 = vrot.slane %v96, %v104
    %v106 = vlaneseq
    %v107 = vshrl.u32 %v106, 7
    %v108 = vsub.s32 2, %v107
    %v109 = vrot.slane %v96, %v108
    %vm113 = vcmask 261120
    %v115 = vsel %vm113, %v83, 0
    %117 = vmatprep.subr.mxu0 %v85
    %118 = vmatpush1.msra.mxu0 %v84
    %119 = vmatprep.subr.mxu0 %v88
    %120 = vmatpush1.msra.mxu0 %v87
    %121 = vmatprep.subr.mxu0 %v91
    %122 = vmatpush1.msra.mxu0 %v90
    %123 = vmatprep.subr.mxu0 %v94
    %124 = vmatpush1.msra.mxu0 %v93
    %125 = vmatprep.subr.mxu0 0.0
    %126 = vmatpush1.msra.mxu0 0.0
    %127 = vmatprep.subr.mxu0 0.0
    %128 = vmatpush1.msra.mxu0 0.0
    %129 = vmatprep.subr.mxu0 0.0
    %130 = vmatpush1.msra.mxu0 0.0
    %131 = vmatprep.subr.mxu0 0.0
    %132 = vmatpush1.msra.mxu0 0.0
    %133 = vmatprep.subr.mxu0 0.0
    %134 = vmatpush1.msra.mxu0 0.0
    %135 = vmatprep.subr.mxu0 0.0
    %136 = vmatpush1.msra.mxu0 0.0
    %137 = vmatprep.subr.mxu0 0.0
    %138 = vmatpush1.msra.mxu0 0.0
    %139 = vmatprep.subr.mxu0 0.0
    %140 = vmatpush1.msra.mxu0 0.0
    %141 = vmatprep.subr.mxu0 0.0
    %142 = vmatpush1.msra.mxu0 0.0
    %143 = vmatprep.subr.mxu0 0.0
    %144 = vmatpush1.msra.mxu0 0.0
    %145 = vmatprep.subr.mxu0 0.0
    %146 = vmatpush1.msra.mxu0 0.0
    %147 = vmatprep.subr.mxu0 0.0
    %148 = vmatpush1.msra.mxu0 0.0
    %149 = vmatprep.subr.mxu0 0.0
    %150 = vmatpush1.msra.mxu0 0.0
    %151 = vmatprep.subr.mxu0 0.0
    %152 = vmatpush1.msra.mxu0 0.0
    %153 = vmatprep.subr.mxu0 0.0
    %154 = vmatpush1.msra.mxu0 0.0
    %155 = vmatprep.subr.mxu0 0.0
    %156 = vmatpush1.msra.mxu0 0.0
    %157 = vmatprep.subr.mxu0 0.0
    %158 = vmatpush1.msra.mxu0 0.0
    %159 = vmatprep.subr.mxu0 0.0
    %160 = vmatpush1.msra.mxu0 0.0
    %161 = vmatprep.subr.mxu0 0.0
    %162 = vmatpush1.msra.mxu0 0.0
    %163 = vmatprep.subr.mxu0 0.0
    %164 = vmatpush1.msra.mxu0 0.0
    %165 = vmatprep.subr.mxu0 0.0
    %166 = vmatpush1.msra.mxu0 0.0
    %167 = vmatprep.subr.mxu0 0.0
    %168 = vmatpush1.msra.mxu0 0.0
    %169 = vmatprep.subr.mxu0 0.0
    %170 = vmatpush1.msra.mxu0 0.0
    %171 = vmatprep.subr.mxu0 0.0
    %172 = vmatpush1.msra.mxu0 0.0
    %173 = vmatprep.subr.mxu0 0.0
    %174 = vmatpush1.msra.mxu0 0.0
    %175 = vmatprep.subr.mxu0 0.0
    %176 = vmatpush1.msra.mxu0 0.0
    %177 = vmatprep.subr.mxu0 0.0
    %178 = vmatpush1.msra.mxu0 0.0
    %179 = vmatprep.subr.mxu0 0.0
    %180 = vmatpush1.msra.mxu0 0.0
    %181 = vmatprep.mubr.f32.mxu0 0.0
    %182 = vmatmul.mubr.f32.gmra.mrb[0].mxu0 %v115
    %v183 = vpop.f32.mrb[0].mxu0
    %v184 = vadd.f32 %v101, %v183
    %v185 = vpop.f32.mrb[0].mxu0
    %v186 = vadd.f32 %v105, %v185
    %187 = vdwg.mxu0
    %188 = vmatprep.subr.mxu0 0.0
    %189 = vmatpush1.msra.mxu0 %v86
    %190 = vmatprep.subr.mxu0 0.0
    %191 = vmatpush1.msra.mxu0 %v89
    %192 = vmatprep.subr.mxu0 0.0
    %193 = vmatpush1.msra.mxu0 %v92
    %194 = vmatprep.subr.mxu0 0.0
    %195 = vmatpush1.msra.mxu0 %v95
    %196 = vmatprep.subr.mxu0 0.0
    %197 = vmatpush1.msra.mxu0 0.0
    %198 = vmatprep.subr.mxu0 0.0
    %199 = vmatpush1.msra.mxu0 0.0
    %200 = vmatprep.subr.mxu0 0.0
    %201 = vmatpush1.msra.mxu0 0.0
    %202 = vmatprep.subr.mxu0 0.0
    %203 = vmatpush1.msra.mxu0 0.0
    %204 = vmatprep.subr.mxu0 0.0
    %205 = vmatpush1.msra.mxu0 0.0
    %206 = vmatprep.subr.mxu0 0.0
    %207 = vmatpush1.msra.mxu0 0.0
    %208 = vmatprep.subr.mxu0 0.0
    %209 = vmatpush1.msra.mxu0 0.0
    %210 = vmatprep.subr.mxu0 0.0
    %211 = vmatpush1.msra.mxu0 0.0
    %212 = vmatprep.subr.mxu0 0.0
    %213 = vmatpush1.msra.mxu0 0.0
    %214 = vmatprep.subr.mxu0 0.0
    %215 = vmatpush1.msra.mxu0 0.0
    %216 = vmatprep.subr.mxu0 0.0
    %217 = vmatpush1.msra.mxu0 0.0
    %218 = vmatprep.subr.mxu0 0.0
    %219 = vmatpush1.msra.mxu0 0.0
    %220 = vmatprep.subr.mxu0 0.0
    %221 = vmatpush1.msra.mxu0 0.0
    %222 = vmatprep.subr.mxu0 0.0
    %223 = vmatpush1.msra.mxu0 0.0
    %224 = vmatprep.subr.mxu0 0.0
    %225 = vmatpush1.msra.mxu0 0.0
    %226 = vmatprep.subr.mxu0 0.0
    %227 = vmatpush1.msra.mxu0 0.0
    %228 = vmatprep.subr.mxu0 0.0
    %229 = vmatpush1.msra.mxu0 0.0
    %230 = vmatprep.subr.mxu0 0.0
    %231 = vmatpush1.msra.mxu0 0.0
    %232 = vmatprep.subr.mxu0 0.0
    %233 = vmatpush1.msra.mxu0 0.0
    %234 = vmatprep.subr.mxu0 0.0
    %235 = vmatpush1.msra.mxu0 0.0
    %236 = vmatprep.subr.mxu0 0.0
    %237 = vmatpush1.msra.mxu0 0.0
    %238 = vmatprep.subr.mxu0 0.0
    %239 = vmatpush1.msra.mxu0 0.0
    %240 = vmatprep.subr.mxu0 0.0
    %241 = vmatpush1.msra.mxu0 0.0
    %242 = vmatprep.subr.mxu0 0.0
    %243 = vmatpush1.msra.mxu0 0.0
    %244 = vmatprep.subr.mxu0 0.0
    %245 = vmatpush1.msra.mxu0 0.0
    %246 = vmatprep.subr.mxu0 0.0
    %247 = vmatpush1.msra.mxu0 0.0
    %248 = vmatprep.subr.mxu0 0.0
    %249 = vmatpush1.msra.mxu0 0.0
    %250 = vmatprep.subr.mxu0 0.0
    %251 = vmatpush1.msra.mxu0 0.0
    %252 = vmatprep.mubr.f32.mxu0 0.0
    %253 = vmatmul.mubr.f32.gmra.mrb[0].mxu0 %v115
    %v254 = vpop.f32.mrb[0].mxu0
    %v255 = vadd.f32 %v109, %v254
    %v256 = vpop.f32.mrb[0].mxu0
    %257 = vdwg.mxu0
    %v258 = vtanh.pop %v184
    %v259 = vtanh.pop %v186
    %v260 = vtanh.pop %v255
    %v261 = vld [vmem:[#allocation7] sm:$0xff]
    %v262 = vld [vmem:[#allocation7 + $0x8] sm:$0xff]
    %v263 = vld [vmem:[#allocation7 + $0x10] sm:$0xff]
    %v264 = vld [vmem:[#allocation7 + $0x18] sm:$0xff]
    %v265 = vld [vmem:[#allocation7 + $0x20] sm:$0xff]
    %v266 = vld [vmem:[#allocation7 + $0x28] sm:$0xff]
    %v267 = vld [vmem:[#allocation7 + $0x30] sm:$0xff]
    %v268 = vld [vmem:[#allocation7 + $0x38] sm:$0xff]
    %v269 = vld [vmem:[#allocation7 + $0x40] sm:$0xff]
    %v270 = vld [vmem:[#allocation7 + $0x48] sm:$0xff]
    %v271 = vld [vmem:[#allocation7 + $0x50] sm:$0xff]
    %v272 = vld [vmem:[#allocation7 + $0x58] sm:$0xff]
    %v273 = vld [vmem:[#allocation7 + $0x60] sm:$0xff]
    %v274 = vld [vmem:[#allocation7 + $0x68] sm:$0xff]
    %v275 = vld [vmem:[#allocation7 + $0x70] sm:$0xff]
    %v276 = vld [vmem:[#allocation7 + $0x78] sm:$0xff]
    %v277 = vld [vmem:[%s4] sm:$0x1]
    %v279 = vlaneseq
    %v280 = vshrl.u32 %v279, 7
    %v281 = vsub.s32 0, %v280
    %v282 = vrot.slane %v277, %v281
    %284 = vmatprep.subr.mxu0 0.0
    %285 = vmatpush1.msra.mxu0 %v261
    %286 = vmatprep.subr.mxu0 0.0
    %287 = vmatpush1.msra.mxu0 %v262
    %288 = vmatprep.subr.mxu0 0.0
    %289 = vmatpush1.msra.mxu0 %v263
    %290 = vmatprep.subr.mxu0 0.0
    %291 = vmatpush1.msra.mxu0 %v264
    %292 = vmatprep.subr.mxu0 0.0
    %293 = vmatpush1.msra.mxu0 %v265
    %294 = vmatprep.subr.mxu0 0.0
    %295 = vmatpush1.msra.mxu0 %v266
    %296 = vmatprep.subr.mxu0 0.0
    %297 = vmatpush1.msra.mxu0 %v267
    %298 = vmatprep.subr.mxu0 0.0
    %299 = vmatpush1.msra.mxu0 %v268
    %300 = vmatprep.subr.mxu0 0.0
    %301 = vmatpush1.msra.mxu0 %v269
    %302 = vmatprep.subr.mxu0 0.0
    %303 = vmatpush1.msra.mxu0 %v270
    %304 = vmatprep.subr.mxu0 0.0
    %305 = vmatpush1.msra.mxu0 %v271
    %306 = vmatprep.subr.mxu0 0.0
    %307 = vmatpush1.msra.mxu0 %v272
    %308 = vmatprep.subr.mxu0 0.0
    %309 = vmatpush1.msra.mxu0 %v273
    %310 = vmatprep.subr.mxu0 0.0
    %311 = vmatpush1.msra.mxu0 %v274
    %312 = vmatprep.subr.mxu0 0.0
    %313 = vmatpush1.msra.mxu0 %v275
    %314 = vmatprep.subr.mxu0 0.0
    %315 = vmatpush1.msra.mxu0 %v276
    %316 = vmatprep.subr.mxu0 0.0
    %317 = vmatpush1.msra.mxu0 0.0
    %318 = vmatprep.subr.mxu0 0.0
    %319 = vmatpush1.msra.mxu0 0.0
    %320 = vmatprep.subr.mxu0 0.0
    %321 = vmatpush1.msra.mxu0 0.0
    %322 = vmatprep.subr.mxu0 0.0
    %323 = vmatpush1.msra.mxu0 0.0
    %324 = vmatprep.subr.mxu0 0.0
    %325 = vmatpush1.msra.mxu0 0.0
    %326 = vmatprep.subr.mxu0 0.0
    %327 = vmatpush1.msra.mxu0 0.0
    %328 = vmatprep.subr.mxu0 0.0
    %329 = vmatpush1.msra.mxu0 0.0
    %330 = vmatprep.subr.mxu0 0.0
    %331 = vmatpush1.msra.mxu0 0.0
    %332 = vmatprep.subr.mxu0 0.0
    %333 = vmatpush1.msra.mxu0 0.0
    %334 = vmatprep.subr.mxu0 0.0
    %335 = vmatpush1.msra.mxu0 0.0
    %336 = vmatprep.subr.mxu0 0.0
    %337 = vmatpush1.msra.mxu0 0.0
    %338 = vmatprep.subr.mxu0 0.0
    %339 = vmatpush1.msra.mxu0 0.0
    %340 = vmatprep.subr.mxu0 0.0
    %341 = vmatpush1.msra.mxu0 0.0
    %342 = vmatprep.subr.mxu0 0.0
    %343 = vmatpush1.msra.mxu0 0.0
    %344 = vmatprep.subr.mxu0 0.0
    %345 = vmatpush1.msra.mxu0 0.0
    %346 = vmatprep.subr.mxu0 0.0
    %347 = vmatpush1.msra.mxu0 0.0
    %348 = vmatprep.mubr.f32.mxu0 0.0
    %349 = vmatmul.mubr.f32.gmra.mrb[0].mxu0 %v258
    %v350 = vpop.f32.mrb[0].mxu0
    %v351 = vadd.f32 %v282, %v350
    %v352 = vpop.f32.mrb[0].mxu0
    %353 = vdwg.mxu0
    %v354 = vtanh.pop %v351
    %v355 = vld [vmem:[#allocation8] sm:$0xff]
    %v356 = vld [vmem:[#allocation8 + $0x8] sm:$0xff]
    %v357 = vld [vmem:[#allocation8 + $0x10] sm:$0xff]
    %v358 = vld [vmem:[#allocation8 + $0x18] sm:$0xff]
    %v359 = vld [vmem:[#allocation8 + $0x20] sm:$0xff]
    %v360 = vld [vmem:[#allocation8 + $0x28] sm:$0xff]
    %v361 = vld [vmem:[#allocation8 + $0x30] sm:$0xff]
    %v362 = vld [vmem:[#allocation8 + $0x38] sm:$0xff]
    %v363 = vld [vmem:[#allocation8 + $0x40] sm:$0xff]
    %v364 = vld [vmem:[#allocation8 + $0x48] sm:$0xff]
    %v365 = vld [vmem:[#allocation8 + $0x50] sm:$0xff]
    %v366 = vld [vmem:[#allocation8 + $0x58] sm:$0xff]
    %v367 = vld [vmem:[#allocation8 + $0x60] sm:$0xff]
    %v368 = vld [vmem:[#allocation8 + $0x68] sm:$0xff]
    %v369 = vld [vmem:[#allocation8 + $0x70] sm:$0xff]
    %v370 = vld [vmem:[#allocation8 + $0x78] sm:$0xff]
    %v371 = vld [vmem:[#allocation8 + $0x80] sm:$0xff]
    %v372 = vld [vmem:[#allocation8 + $0x88] sm:$0xff]
    %v373 = vld [vmem:[#allocation8 + $0x90] sm:$0xff]
    %v374 = vld [vmem:[#allocation8 + $0x98] sm:$0xff]
    %v375 = vld [vmem:[#allocation8 + $0xa0] sm:$0xff]
    %v376 = vld [vmem:[#allocation8 + $0xa8] sm:$0xff]
    %v377 = vld [vmem:[#allocation8 + $0xb0] sm:$0xff]
    %v378 = vld [vmem:[#allocation8 + $0xb8] sm:$0xff]
    %v379 = vld [vmem:[#allocation8 + $0xc0] sm:$0xff]
    %v380 = vld [vmem:[#allocation8 + $0xc8] sm:$0xff]
    %v381 = vld [vmem:[#allocation8 + $0xd0] sm:$0xff]
    %v382 = vld [vmem:[#allocation8 + $0xd8] sm:$0xff]
    %v383 = vld [vmem:[#allocation8 + $0xe0] sm:$0xff]
    %v384 = vld [vmem:[#allocation8 + $0xe8] sm:$0xff]
    %v385 = vld [vmem:[#allocation8 + $0xf0] sm:$0xff]
    %v386 = vld [vmem:[#allocation8 + $0xf8] sm:$0xff]
    %v387 = vld [vmem:[#allocation8 + $0x100] sm:$0xff]
    %v388 = vld [vmem:[#allocation8 + $0x108] sm:$0xff]
    %v389 = vld [vmem:[#allocation8 + $0x110] sm:$0xff]
    %v390 = vld [vmem:[#allocation8 + $0x118] sm:$0xff]
    %v391 = vld [vmem:[#allocation8 + $0x120] sm:$0xff]
    %v392 = vld [vmem:[#allocation8 + $0x128] sm:$0xff]
    %v393 = vld [vmem:[#allocation8 + $0x130] sm:$0xff]
    %v394 = vld [vmem:[#allocation8 + $0x138] sm:$0xff]
    %v395 = vld [vmem:[#allocation8 + $0x140] sm:$0xff]
    %v396 = vld [vmem:[#allocation8 + $0x148] sm:$0xff]
    %v397 = vld [vmem:[#allocation8 + $0x150] sm:$0xff]
    %v398 = vld [vmem:[#allocation8 + $0x158] sm:$0xff]
    %v399 = vld [vmem:[#allocation8 + $0x160] sm:$0xff]
    %v400 = vld [vmem:[#allocation8 + $0x168] sm:$0xff]
    %v401 = vld [vmem:[#allocation8 + $0x170] sm:$0xff]
    %v402 = vld [vmem:[#allocation8 + $0x178] sm:$0xff]
    %v403 = vld [vmem:[#allocation8 + $0x180] sm:$0xff]
    %v404 = vld [vmem:[#allocation8 + $0x188] sm:$0xff]
    %v405 = vld [vmem:[#allocation8 + $0x190] sm:$0xff]
    %v406 = vld [vmem:[#allocation8 + $0x198] sm:$0xff]
    %v407 = vld [vmem:[#allocation8 + $0x1a0] sm:$0xff]
    %v408 = vld [vmem:[#allocation8 + $0x1a8] sm:$0xff]
    %v409 = vld [vmem:[#allocation8 + $0x1b0] sm:$0xff]
    %v410 = vld [vmem:[#allocation8 + $0x1b8] sm:$0xff]
    %v411 = vld [vmem:[#allocation8 + $0x1c0] sm:$0xff]
    %v412 = vld [vmem:[#allocation8 + $0x1c8] sm:$0xff]
    %v413 = vld [vmem:[#allocation8 + $0x1d0] sm:$0xff]
    %v414 = vld [vmem:[#allocation8 + $0x1d8] sm:$0xff]
    %v415 = vld [vmem:[#allocation8 + $0x1e0] sm:$0xff]
    %v416 = vld [vmem:[#allocation8 + $0x1e8] sm:$0xff]
    %v417 = vld [vmem:[#allocation8 + $0x1f0] sm:$0xff]
    %v418 = vld [vmem:[#allocation8 + $0x1f8] sm:$0xff]
    %v419 = vld [vmem:[%s6] sm:$0x3]
    %v421 = vlaneseq
    %v422 = vshrl.u32 %v421, 7
    %v423 = vsub.s32 0, %v422
    %v424 = vrot.slane %v419, %v423
    %v425 = vlaneseq
    %v426 = vshrl.u32 %v425, 7
    %v427 = vsub.s32 1, %v426
    %v428 = vrot.slane %v419, %v427
    %431 = vmatprep.subr.mxu0 %v356
    %432 = vmatpush1.msra.mxu0 %v355
    %433 = vmatprep.subr.mxu0 %v358
    %434 = vmatpush1.msra.mxu0 %v357
    %435 = vmatprep.subr.mxu0 %v360
    %436 = vmatpush1.msra.mxu0 %v359
    %437 = vmatprep.subr.mxu0 %v362
    %438 = vmatpush1.msra.mxu0 %v361
    %439 = vmatprep.subr.mxu0 %v364
    %440 = vmatpush1.msra.mxu0 %v363
    %441 = vmatprep.subr.mxu0 %v366
    %442 = vmatpush1.msra.mxu0 %v365
    %443 = vmatprep.subr.mxu0 %v368
    %444 = vmatpush1.msra.mxu0 %v367
    %445 = vmatprep.subr.mxu0 %v370
    %446 = vmatpush1.msra.mxu0 %v369
    %447 = vmatprep.subr.mxu0 %v372
    %448 = vmatpush1.msra.mxu0 %v371
    %449 = vmatprep.subr.mxu0 %v374
    %450 = vmatpush1.msra.mxu0 %v373
    %451 = vmatprep.subr.mxu0 %v376
    %452 = vmatpush1.msra.mxu0 %v375
    %453 = vmatprep.subr.mxu0 %v378
    %454 = vmatpush1.msra.mxu0 %v377
    %455 = vmatprep.subr.mxu0 %v380
    %456 = vmatpush1.msra.mxu0 %v379
    %457 = vmatprep.subr.mxu0 %v382
    %458 = vmatpush1.msra.mxu0 %v381
    %459 = vmatprep.subr.mxu0 %v384
    %460 = vmatpush1.msra.mxu0 %v383
    %461 = vmatprep.subr.mxu0 %v386
    %462 = vmatpush1.msra.mxu0 %v385
    %463 = vmatprep.subr.mxu0 %v388
    %464 = vmatpush1.msra.mxu0 %v387
    %465 = vmatprep.subr.mxu0 %v390
    %466 = vmatpush1.msra.mxu0 %v389
    %467 = vmatprep.subr.mxu0 %v392
    %468 = vmatpush1.msra.mxu0 %v391
    %469 = vmatprep.subr.mxu0 %v394
    %470 = vmatpush1.msra.mxu0 %v393
    %471 = vmatprep.subr.mxu0 %v396
    %472 = vmatpush1.msra.mxu0 %v395
    %473 = vmatprep.subr.mxu0 %v398
    %474 = vmatpush1.msra.mxu0 %v397
    %475 = vmatprep.subr.mxu0 %v400
    %476 = vmatpush1.msra.mxu0 %v399
    %477 = vmatprep.subr.mxu0 %v402
    %478 = vmatpush1.msra.mxu0 %v401
    %479 = vmatprep.subr.mxu0 %v404
    %480 = vmatpush1.msra.mxu0 %v403
    %481 = vmatprep.subr.mxu0 %v406
    %482 = vmatpush1.msra.mxu0 %v405
    %483 = vmatprep.subr.mxu0 %v408
    %484 = vmatpush1.msra.mxu0 %v407
    %485 = vmatprep.subr.mxu0 %v410
    %486 = vmatpush1.msra.mxu0 %v409
    %487 = vmatprep.subr.mxu0 %v412
    %488 = vmatpush1.msra.mxu0 %v411
    %489 = vmatprep.subr.mxu0 %v414
    %490 = vmatpush1.msra.mxu0 %v413
    %491 = vmatprep.subr.mxu0 %v416
    %492 = vmatpush1.msra.mxu0 %v415
    %493 = vmatprep.subr.mxu0 %v418
    %494 = vmatpush1.msra.mxu0 %v417
    %495 = vmatprep.mubr.f32.mxu0 %v260
    %496 = vmatmul.mubr.f32.gmra.mrb[0].mxu0 %v259
    %v497 = vpop.f32.mrb[0].mxu0
    %v498 = vadd.f32 %v424, %v497
    %v499 = vpop.f32.mrb[0].mxu0
    %v500 = vadd.f32 %v428, %v499
    %501 = vdwg.mxu0
    %v502 = vtanh.pop %v498
    %v503 = vtanh.pop %v500
    %504 = vst [vmem:[#allocation10] sm:$0xff] %v354
    %505 = vst [vmem:[#allocation11] sm:$0xff] %v502
    %506 = vst [vmem:[#allocation11 + $0x8] sm:$0xff] %v503
    // Predicated region
    $region46: #{custom_network_forward.1} parent=1 // pred_check
      _
    $region47: #{custom_network_forward.1} parent=1 // pred_check_branch
      %508 = sbr.rel (0) target = $region49
    $region48: #{custom_network_forward.1} parent=1 // pred_region
      %s510 = ssub.s32 128, 128
      %511 = vsyncadd [#allocation4], %s510
      %s513 = sshll.u32 [#allocation10], 4
      %s514 = int_to_ptr.vmem [resolvable:$true] %s513
      %516 = dma.vmem_to_hbm [thread:$0]  %s514, 128, %s7, [#allocation4]
    $region49: #{custom_network_forward.1} parent=1 // pred_fallthru
      _
    // Predicated region
    $region50: #{custom_network_forward.1} parent=1 // pred_check
      _
    $region51: #{custom_network_forward.1} parent=1 // pred_check_branch
      %518 = sbr.rel (0) target = $region53
    $region52: #{custom_network_forward.1} parent=1 // pred_region
      %s520 = ssub.s32 256, 256
      %521 = vsyncadd [#allocation12], %s520
      %s523 = sshll.u32 [#allocation11], 4
      %s524 = int_to_ptr.vmem [resolvable:$true] %s523
      %526 = dma.vmem_to_hbm [thread:$0]  %s524, 256, %s8, [#allocation12]
    $region53: #{custom_network_forward.1} parent=1 // pred_fallthru
      _
    // Predicated region
    $region54: #{custom_network_forward.1} parent=1 // pred_check
      _
    $region55: #{custom_network_forward.1} parent=1 // pred_check_branch
      %528 = sbr.rel (0) target = $region57
    $region56: #{custom_network_forward.1} parent=1 // pred_region
      %529 = dma.done [#allocation4], 128
    $region57: #{custom_network_forward.1} parent=1 // pred_fallthru
      _
    // Predicated region
    $region58: #{custom_network_forward.1} parent=1 // pred_check
      _
    $region59: #{custom_network_forward.1} parent=1 // pred_check_branch
      %531 = sbr.rel (0) target = $region61
    $region60: #{custom_network_forward.1} parent=1 // pred_region
      %532 = dma.done [#allocation12], 256
    $region61: #{custom_network_forward.1} parent=1 // pred_fallthru
      _
    %533 = vsyncpa [#allocation3], 1
    %534 = vsyncpa [#allocation6], 1
    %535 = vsyncpa [#allocation9], 1
    %536 = vsyncpa [#allocation4], 1
    %537 = vsyncpa [#allocation12], 1

</llo_original>
